<compile_context>
chip_gen: v5e
topology: v5e:2x2
jax: 0.10.0
libtpu: 0.0.40
codegen_flags: <defaults>
</compile_context>

<pallas_src>
import functools

import jax
import jax.numpy as jnp
from jax.experimental import pallas as pl
from jax.experimental.pallas import tpu as pltpu


def _conv1x1_kernel(x_ref, w_ref, o_ref, *, compute_dtype):
    # x_ref: [bn, C_in, HW]   (input dtype, e.g. f32 — cast happens in-kernel)
    # w_ref: [C_out, C_in]    (input dtype)
    # o_ref: [bn, C_out, HW]  (input dtype; accumulation is f32)
    w = w_ref[...].astype(compute_dtype)
    # Static unroll over the (small) batch block; each iteration is one MXU
    # matmul [C_out, C_in] @ [C_in, HW] with f32 accumulation.
    for n in range(x_ref.shape[0]):
        o_ref[n] = jnp.dot(
            w,
            x_ref[n].astype(compute_dtype),
            preferred_element_type=jnp.float32,
        ).astype(o_ref.dtype)


def _largest_divisor_leq(n, cap):
    bn = max(1, min(n, cap))
    while n % bn:
        bn -= 1
    return bn


def conv2d_1x1(x_nchw, weight_oihw, *, compute_dtype=jnp.bfloat16,
               max_batch_block=8):
    """1x1 conv, stride 1, no bias.  x: [N, C_in, H, W], weight: [C_out, C_in, 1, 1].

    compute_dtype: MXU input dtype.  bfloat16 (default, f32 accumulation) is a
    single MXU pass; pass jnp.float32 for strict f32 parity with the PyTorch
    module — at this size the extra MXU passes are irrelevant.
    """
    N, C_in, H, W = x_nchw.shape
    C_out = weight_oihw.shape[0]
    HW = H * W

    # Free reshapes (no transposes); dtype untouched — casts happen in-kernel.
    x_mat = x_nchw.reshape(N, C_in, HW)            # [N, C_in, HW]
    w_mat = weight_oihw.reshape(C_out, C_in)       # [C_out, C_in]

    # Block a few batch elements per grid step (N=1 here -> single step).
    bn = _largest_divisor_leq(N, max_batch_block)

    itemsize = jnp.dtype(x_nchw.dtype).itemsize
    cost = pl.CostEstimate(
        flops=2 * N * C_out * C_in * HW,
        transcendentals=0,
        bytes_accessed=(N * C_in * HW + C_out * C_in + N * C_out * HW) * itemsize,
    )

    out = pl.pallas_call(
        functools.partial(_conv1x1_kernel, compute_dtype=compute_dtype),
        # Output dtype follows the input dtype (matches the PyTorch module:
        # f32 in -> f32 out); accumulation is f32 regardless.
        out_shape=jax.ShapeDtypeStruct((N, C_out, HW), x_nchw.dtype),
        grid=(N // bn,),
        in_specs=[
            # Last two block dims equal the full array dims -> no (8,128)
            # divisibility constraint, single DMA per step.
            pl.BlockSpec((bn, C_in, HW), lambda n: (n, 0, 0)),
            pl.BlockSpec((C_out, C_in), lambda n: (0, 0)),
        ],
        out_specs=pl.BlockSpec((bn, C_out, HW), lambda n: (n, 0, 0)),
        compiler_params=pltpu.CompilerParams(
            dimension_semantics=("parallel",),
        ),
        cost_estimate=cost,
    )(x_mat, w_mat)

    # [N, C_out, H*W] -> NCHW is again a free reshape.
    return out.reshape(N, C_out, H, W)


if __name__ == "__main__":
    key = jax.random.PRNGKey(0)
    k_x, k_w = jax.random.split(key)

    # Shapes implied by the module: input [1, 832, 7, 7], weight [32, 832, 1, 1].
    x = jax.random.normal(k_x, (1, 832, 7, 7), dtype=jnp.float32)
    weight = jax.random.normal(k_w, (32, 832, 1, 1), dtype=jnp.float32) * (
        1.0 / jnp.sqrt(832.0)
    )

    y = jax.block_until_ready(conv2d_1x1(x, weight))
    assert y.shape == (1, 32, 7, 7), y.shape
    assert y.dtype == jnp.float32, y.dtype

    w2d = weight.reshape(32, 832)

    # Reference 1: full-f32 math (module semantics).  Kernel casts inputs to
    # bf16 in-kernel with f32 accumulation, so tolerance covers bf16 rounding
    # over K=832.
    ref_f32 = jnp.einsum(
        "nchw,oc->nohw", x, w2d, precision=jax.lax.Precision.HIGHEST
    )
    err_f32 = float(jnp.max(jnp.abs(y - ref_f32)))
    assert jnp.allclose(y, ref_f32, atol=5e-2, rtol=5e-2), err_f32

    # Reference 2: matched bf16 input rounding, f32 accumulation -> tight check.
    x_bf = x.astype(jnp.bfloat16).astype(jnp.float32)
    w_bf = w2d.astype(jnp.bfloat16).astype(jnp.float32)
    ref_bf = jnp.einsum(
        "nchw,oc->nohw", x_bf, w_bf, precision=jax.lax.Precision.HIGHEST
    )
    err_bf = float(jnp.max(jnp.abs(y - ref_bf)))
    assert jnp.allclose(y, ref_bf, atol=2e-3, rtol=2e-3), err_bf

    # Exercise the batch-blocking path (bn > 1, statically unrolled dots).
    x4 = jax.random.normal(jax.random.PRNGKey(1), (4, 832, 7, 7), dtype=jnp.float32)
    y4 = jax.block_until_ready(conv2d_1x1(x4, weight))
    x4_bf = x4.astype(jnp.bfloat16).astype(jnp.float32)
    ref4 = jnp.einsum(
        "nchw,oc->nohw", x4_bf, w_bf, precision=jax.lax.Precision.HIGHEST
    )
    err4 = float(jnp.max(jnp.abs(y4 - ref4)))
    assert jnp.allclose(y4, ref4, atol=2e-3, rtol=2e-3), err4

    print("KERNEL_OK")
</pallas_src>

<mosaic_0001>
module attributes {stable_mosaic.version = 11 : i64} {
  func.func @_conv1x1_kernel(%arg0: i32, %arg1: memref<1x832x49xf32, #tpu.memory_space<vmem>>, %arg2: memref<32x832xf32, #tpu.memory_space<vmem>>, %arg3: memref<1x32x49xf32, #tpu.memory_space<vmem>>) attributes {dimension_semantics = [#tpu.dimension_semantics<parallel>], iteration_bounds = array<i64: 1>, scalar_prefetch = 0 : i64, scratch_operands = 0 : i64, tpu.core_type = #tpu.core_type<tc>, window_params = [{transform_indices = @transform_0, window_bounds = array<i64: 1, 832, 49>}, {pipeline_mode = #tpu.pipeline_mode<synchronous>, transform_indices = @transform_1, window_bounds = array<i64: 32, 832>}, {transform_indices = @transform_2, window_bounds = array<i64: 1, 32, 49>}]} {
    %c0 = arith.constant 0 : index
    %c0_0 = arith.constant 0 : index
    %0 = vector.load %arg2[%c0, %c0_0] : memref<32x832xf32, #tpu.memory_space<vmem>>, vector<32x832xf32>
    %1 = arith.truncf %0 : vector<32x832xf32> to vector<32x832xbf16>
    %c0_1 = arith.constant 0 : index
    %c0_2 = arith.constant 0 : index
    %c0_3 = arith.constant 0 : index
    %2 = vector.load %arg1[%c0_1, %c0_2, %c0_3] : memref<1x832x49xf32, #tpu.memory_space<vmem>>, vector<1x832x49xf32>
    %3 = vector.shape_cast %2 : vector<1x832x49xf32> to vector<832x49xf32>
    %4 = arith.truncf %3 : vector<832x49xf32> to vector<832x49xbf16>
    %cst = arith.constant dense<0.000000e+00> : vector<32x49xf32>
    %5 = tpu.matmul %1, %4, %cst {dimension_numbers = #tpu.dot_dimension_numbers<[1], [0], [0], [1], [0, 0, 1, 1], [], []>} : vector<32x832xbf16>, vector<832x49xbf16>, vector<32x49xf32> -> vector<32x49xf32>
    %c0_4 = arith.constant 0 : index
    %c0_5 = arith.constant 0 : index
    %c0_6 = arith.constant 0 : index
    %6 = vector.load %arg3[%c0_4, %c0_5, %c0_6] : memref<1x32x49xf32, #tpu.memory_space<vmem>>, vector<1x32x49xf32>
    %7 = vector.shape_cast %6 : vector<1x32x49xf32> to vector<32x49xf32>
    %8 = vector.shape_cast %5 : vector<32x49xf32> to vector<1x32x49xf32>
    tpu.vector_store %arg3[%c0_4, %c0_5, %c0_6], %8 {strides = array<i32>} : memref<1x32x49xf32, #tpu.memory_space<vmem>>, vector<1x32x49xf32>,
    return
  }
  func.func @transform_0(%arg0: i32) -> (i32, i32, i32) {
    %c0_i32 = arith.constant 0 : i32
    %c0_i32_0 = arith.constant 0 : i32
    %c0_i32_1 = arith.constant 0 : i32
    return %arg0, %c0_i32, %c0_i32_0 : i32, i32, i32
  }
  func.func @transform_1(%arg0: i32) -> (i32, i32) {
    %c0_i32 = arith.constant 0 : i32
    %c0_i32_0 = arith.constant 0 : i32
    %c0_i32_1 = arith.constant 0 : i32
    return %c0_i32, %c0_i32_0 : i32, i32
  }
  func.func @transform_2(%arg0: i32) -> (i32, i32, i32) {
    %c0_i32 = arith.constant 0 : i32
    %c0_i32_0 = arith.constant 0 : i32
    %c0_i32_1 = arith.constant 0 : i32
    return %arg0, %c0_i32, %c0_i32_0 : i32, i32, i32
  }
}

</mosaic_0001>

<llo_original>
// kernel: tpu_custom_call.1
$region0: #{tpu_custom_call.1}
  #allocation0 [shape = 'u32[]', space=smem, size = 0x4, offset = 0x4, fixed_abs, tag = 'smem constant byte address 0x4 - core index']
  #allocation1 [shape = 'u32[72,128]{1,0:T(1,128)}', space=vmem, size = 0x9000, scoped, tag = 'internal scratch']
  %s0 = inlined_call_operand.vmem [shape: f32[1,832,49], index: 0, kind: input, shape index: {}]
  %s1 = inlined_call_operand.vmem [shape: f32[32,832], index: 1, kind: input, shape index: {}]
  %s2 = inlined_call_operand.hbm [shape: f32[1,32,49], index: 2, kind: output, shape index: {}]
  %s3 = sld [smem:[#allocation0]]
  $region18: #{tpu_custom_call.1} parent=0
    _
  %s5 = ssub.s32 1, %s3
  %s6 = scalar_select 0, %s5, %s3
  $region1: #{tpu_custom_call.1} parent=0
    #allocation2 [shape = 'u8[16384]{0}', space=vmem, size = 0x4000, scoped, tag = 'output window, operand 0, single buffered']
    #allocation3 [shape = 's32[1]{0}', space=sflag, size = 0x4, scoped, tag = 'scoped memory for tpu_custom_call.1']
    %7 = vsyncpa [#allocation3], 0
    // Predicated region
    $region2: #{tpu_custom_call.1} parent=1 // pred_check
      _
    $region3: #{tpu_custom_call.1} parent=1 // pred_check_branch
      %9 = sbr.rel (0) target = $region5
    $region4: #{tpu_custom_call.1} parent=1 // pred_region
      _
    $region5: #{tpu_custom_call.1} parent=1 // pred_fallthru
      _
    // Predicated region
    $region6: #{tpu_custom_call.1} parent=1 // pred_check
      _
    $region7: #{tpu_custom_call.1} parent=1 // pred_check_branch
      %11 = sbr.rel (0) target = $region9
    $region8: #{tpu_custom_call.1} parent=1 // pred_region
      _
    $region9: #{tpu_custom_call.1} parent=1 // pred_fallthru
      _
    %v13 = vld [vmem:[%s1] sm:$0xff]
    %v14 = vld [vmem:[%s1 + $0x8] sm:$0xff]
    %v15 = vld [vmem:[%s1 + $0x10] sm:$0xff]
    %v16 = vld [vmem:[%s1 + $0x18] sm:$0xff]
    %v17 = vld [vmem:[%s1 + $0x20] sm:$0xff]
    %v18 = vld [vmem:[%s1 + $0x28] sm:$0xff]
    %v19 = vld [vmem:[%s1 + $0x30] sm:$0xff]
    %v20 = vld [vmem:[%s1 + $0x38] sm:$0xff]
    %v21 = vld [vmem:[%s1 + $0x40] sm:$0xff]
    %v22 = vld [vmem:[%s1 + $0x48] sm:$0xff]
    %v23 = vld [vmem:[%s1 + $0x50] sm:$0xff]
    %v24 = vld [vmem:[%s1 + $0x58] sm:$0xff]
    %v25 = vld [vmem:[%s1 + $0x60] sm:$0xff]
    %v26 = vld [vmem:[%s1 + $0x68] sm:$0xff]
    %v27 = vld [vmem:[%s1 + $0x70] sm:$0xff]
    %v28 = vld [vmem:[%s1 + $0x78] sm:$0xff]
    %v29 = vld [vmem:[%s1 + $0x80] sm:$0xff]
    %v30 = vld [vmem:[%s1 + $0x88] sm:$0xff]
    %v31 = vld [vmem:[%s1 + $0x90] sm:$0xff]
    %v32 = vld [vmem:[%s1 + $0x98] sm:$0xff]
    %v33 = vld [vmem:[%s1 + $0xa0] sm:$0xff]
    %v34 = vld [vmem:[%s1 + $0xa8] sm:$0xff]
    %v35 = vld [vmem:[%s1 + $0xb0] sm:$0xff]
    %v36 = vld [vmem:[%s1 + $0xb8] sm:$0xff]
    %v37 = vld [vmem:[%s1 + $0xc0] sm:$0xff]
    %v38 = vld [vmem:[%s1 + $0xc8] sm:$0xff]
    %v39 = vld [vmem:[%s1 + $0xd0] sm:$0xff]
    %v40 = vld [vmem:[%s1 + $0xd8] sm:$0xff]
    %v41 = vpack.c.bf16 %v20, %v13
    %v42 = vpack.c.bf16 %v21, %v14
    %v43 = vpack.c.bf16 %v22, %v15
    %v44 = vpack.c.bf16 %v23, %v16
    %v45 = vpack.c.bf16 %v24, %v17
    %v46 = vpack.c.bf16 %v25, %v18
    %v47 = vpack.c.bf16 %v26, %v19
    %v48 = vpack.c.bf16 %v34, %v27
    %v49 = vpack.c.bf16 %v35, %v28
    %v50 = vpack.c.bf16 %v36, %v29
    %v51 = vpack.c.bf16 %v37, %v30
    %v52 = vpack.c.bf16 %v38, %v31
    %v53 = vpack.c.bf16 %v39, %v32
    %v54 = vpack.c.bf16 %v40, %v33
    %v55 = vld [vmem:[%s0] sm:$0xff]
    %v56 = vld [vmem:[%s0 + $0x8] sm:$0xff]
    %v57 = vld [vmem:[%s0 + $0x10] sm:$0xff]
    %v58 = vld [vmem:[%s0 + $0x18] sm:$0xff]
    %v59 = vld [vmem:[%s0 + $0x20] sm:$0xff]
    %v60 = vld [vmem:[%s0 + $0x28] sm:$0xff]
    %v61 = vld [vmem:[%s0 + $0x30] sm:$0xff]
    %v62 = vld [vmem:[%s0 + $0x38] sm:$0xff]
    %v63 = vld [vmem:[%s0 + $0x40] sm:$0xff]
    %v64 = vld [vmem:[%s0 + $0x48] sm:$0xff]
    %v65 = vld [vmem:[%s0 + $0x50] sm:$0xff]
    %v66 = vld [vmem:[%s0 + $0x58] sm:$0xff]
    %v67 = vld [vmem:[%s0 + $0x60] sm:$0xff]
    %v68 = vld [vmem:[%s0 + $0x68] sm:$0xff]
    %v69 = vld [vmem:[%s0 + $0x70] sm:$0xff]
    %v70 = vld [vmem:[%s0 + $0x78] sm:$0xff]
    %v71 = vld [vmem:[%s0 + $0x80] sm:$0xff]
    %v72 = vld [vmem:[%s0 + $0x88] sm:$0xff]
    %v73 = vld [vmem:[%s0 + $0x90] sm:$0xff]
    %v74 = vld [vmem:[%s0 + $0x98] sm:$0xff]
    %v75 = vld [vmem:[%s0 + $0xa0] sm:$0xff]
    %v76 = vld [vmem:[%s0 + $0xa8] sm:$0xff]
    %v77 = vld [vmem:[%s0 + $0xb0] sm:$0xff]
    %v78 = vld [vmem:[%s0 + $0xb8] sm:$0xff]
    %v79 = vld [vmem:[%s0 + $0xc0] sm:$0xff]
    %v80 = vld [vmem:[%s0 + $0xc8] sm:$0xff]
    %v81 = vld [vmem:[%s0 + $0xd0] sm:$0xff]
    %v82 = vld [vmem:[%s0 + $0xd8] sm:$0xff]
    %v83 = vld [vmem:[%s0 + $0xe0] sm:$0xff]
    %v84 = vld [vmem:[%s0 + $0xe8] sm:$0xff]
    %v85 = vld [vmem:[%s0 + $0xf0] sm:$0xff]
    %v86 = vld [vmem:[%s0 + $0xf8] sm:$0xff]
    %v87 = vld [vmem:[%s0 + $0x100] sm:$0xff]
    %v88 = vld [vmem:[%s0 + $0x108] sm:$0xff]
    %v89 = vld [vmem:[%s0 + $0x110] sm:$0xff]
    %v90 = vld [vmem:[%s0 + $0x118] sm:$0xff]
    %v91 = vld [vmem:[%s0 + $0x120] sm:$0xff]
    %v92 = vld [vmem:[%s0 + $0x128] sm:$0xff]
    %v93 = vld [vmem:[%s0 + $0x130] sm:$0xff]
    %v94 = vld [vmem:[%s0 + $0x138] sm:$0xff]
    %v95 = vld [vmem:[%s0 + $0x140] sm:$0xff]
    %v96 = vld [vmem:[%s0 + $0x148] sm:$0xff]
    %v97 = vld [vmem:[%s0 + $0x150] sm:$0xff]
    %v98 = vld [vmem:[%s0 + $0x158] sm:$0xff]
    %v99 = vld [vmem:[%s0 + $0x160] sm:$0xff]
    %v100 = vld [vmem:[%s0 + $0x168] sm:$0xff]
    %v101 = vld [vmem:[%s0 + $0x170] sm:$0xff]
    %v102 = vld [vmem:[%s0 + $0x178] sm:$0xff]
    %v103 = vld [vmem:[%s0 + $0x180] sm:$0xff]
    %v104 = vld [vmem:[%s0 + $0x188] sm:$0xff]
    %v105 = vld [vmem:[%s0 + $0x190] sm:$0xff]
    %v106 = vld [vmem:[%s0 + $0x198] sm:$0xff]
    %v107 = vld [vmem:[%s0 + $0x1a0] sm:$0xff]
    %v108 = vld [vmem:[%s0 + $0x1a8] sm:$0xff]
    %v109 = vld [vmem:[%s0 + $0x1b0] sm:$0xff]
    %v110 = vld [vmem:[%s0 + $0x1b8] sm:$0xff]
    %v111 = vld [vmem:[%s0 + $0x1c0] sm:$0xff]
    %v112 = vld [vmem:[%s0 + $0x1c8] sm:$0xff]
    %v113 = vld [vmem:[%s0 + $0x1d0] sm:$0xff]
    %v114 = vld [vmem:[%s0 + $0x1d8] sm:$0xff]
    %v115 = vld [vmem:[%s0 + $0x1e0] sm:$0xff]
    %v116 = vld [vmem:[%s0 + $0x1e8] sm:$0xff]
    %v117 = vld [vmem:[%s0 + $0x1f0] sm:$0xff]
    %v118 = vld [vmem:[%s0 + $0x1f8] sm:$0xff]
    %v119 = vld [vmem:[%s0 + $0x200] sm:$0xff]
    %v120 = vld [vmem:[%s0 + $0x208] sm:$0xff]
    %v121 = vld [vmem:[%s0 + $0x210] sm:$0xff]
    %v122 = vld [vmem:[%s0 + $0x218] sm:$0xff]
    %v123 = vld [vmem:[%s0 + $0x220] sm:$0xff]
    %v124 = vld [vmem:[%s0 + $0x228] sm:$0xff]
    %v125 = vld [vmem:[%s0 + $0x230] sm:$0xff]
    %v126 = vld [vmem:[%s0 + $0x238] sm:$0xff]
    %v127 = vld [vmem:[%s0 + $0x240] sm:$0xff]
    %v128 = vld [vmem:[%s0 + $0x248] sm:$0xff]
    %v129 = vld [vmem:[%s0 + $0x250] sm:$0xff]
    %v130 = vld [vmem:[%s0 + $0x258] sm:$0xff]
    %v131 = vld [vmem:[%s0 + $0x260] sm:$0xff]
    %v132 = vld [vmem:[%s0 + $0x268] sm:$0xff]
    %v133 = vld [vmem:[%s0 + $0x270] sm:$0xff]
    %v134 = vld [vmem:[%s0 + $0x278] sm:$0xff]
    %v135 = vld [vmem:[%s0 + $0x280] sm:$0xff]
    %v136 = vld [vmem:[%s0 + $0x288] sm:$0xff]
    %v137 = vld [vmem:[%s0 + $0x290] sm:$0xff]
    %v138 = vld [vmem:[%s0 + $0x298] sm:$0xff]
    %v139 = vld [vmem:[%s0 + $0x2a0] sm:$0xff]
    %v140 = vld [vmem:[%s0 + $0x2a8] sm:$0xff]
    %v141 = vld [vmem:[%s0 + $0x2b0] sm:$0xff]
    %v142 = vld [vmem:[%s0 + $0x2b8] sm:$0xff]
    %v143 = vld [vmem:[%s0 + $0x2c0] sm:$0xff]
    %v144 = vld [vmem:[%s0 + $0x2c8] sm:$0xff]
    %v145 = vld [vmem:[%s0 + $0x2d0] sm:$0xff]
    %v146 = vld [vmem:[%s0 + $0x2d8] sm:$0xff]
    %v147 = vld [vmem:[%s0 + $0x2e0] sm:$0xff]
    %v148 = vld [vmem:[%s0 + $0x2e8] sm:$0xff]
    %v149 = vld [vmem:[%s0 + $0x2f0] sm:$0xff]
    %v150 = vld [vmem:[%s0 + $0x2f8] sm:$0xff]
    %v151 = vld [vmem:[%s0 + $0x300] sm:$0xff]
    %v152 = vld [vmem:[%s0 + $0x308] sm:$0xff]
    %v153 = vld [vmem:[%s0 + $0x310] sm:$0xff]
    %v154 = vld [vmem:[%s0 + $0x318] sm:$0xff]
    %v155 = vld [vmem:[%s0 + $0x320] sm:$0xff]
    %v156 = vld [vmem:[%s0 + $0x328] sm:$0xff]
    %v157 = vld [vmem:[%s0 + $0x330] sm:$0xff]
    %v158 = vld [vmem:[%s0 + $0x338] sm:$0xff]
    %v159 = vpack.c.bf16 %v56, %v55
    %v160 = vpack.c.bf16 %v58, %v57
    %v161 = vpack.c.bf16 %v60, %v59
    %v162 = vpack.c.bf16 %v62, %v61
    %v163 = vpack.c.bf16 %v64, %v63
    %v164 = vpack.c.bf16 %v66, %v65
    %v165 = vpack.c.bf16 %v68, %v67
    %v166 = vpack.c.bf16 %v70, %v69
    %v167 = vpack.c.bf16 %v72, %v71
    %v168 = vpack.c.bf16 %v74, %v73
    %v169 = vpack.c.bf16 %v76, %v75
    %v170 = vpack.c.bf16 %v78, %v77
    %v171 = vpack.c.bf16 %v80, %v79
    %v172 = vpack.c.bf16 %v82, %v81
    %v173 = vpack.c.bf16 %v84, %v83
    %v174 = vpack.c.bf16 %v86, %v85
    %v175 = vpack.c.bf16 %v88, %v87
    %v176 = vpack.c.bf16 %v90, %v89
    %v177 = vpack.c.bf16 %v92, %v91
    %v178 = vpack.c.bf16 %v94, %v93
    %v179 = vpack.c.bf16 %v96, %v95
    %v180 = vpack.c.bf16 %v98, %v97
    %v181 = vpack.c.bf16 %v100, %v99
    %v182 = vpack.c.bf16 %v102, %v101
    %v183 = vpack.c.bf16 %v104, %v103
    %v184 = vpack.c.bf16 %v106, %v105
    %v185 = vpack.c.bf16 %v108, %v107
    %v186 = vpack.c.bf16 %v110, %v109
    %v187 = vpack.c.bf16 %v112, %v111
    %v188 = vpack.c.bf16 %v114, %v113
    %v189 = vpack.c.bf16 %v116, %v115
    %v190 = vpack.c.bf16 %v118, %v117
    %v191 = vpack.c.bf16 %v120, %v119
    %v192 = vpack.c.bf16 %v122, %v121
    %v193 = vpack.c.bf16 %v124, %v123
    %v194 = vpack.c.bf16 %v126, %v125
    %v195 = vpack.c.bf16 %v128, %v127
    %v196 = vpack.c.bf16 %v130, %v129
    %v197 = vpack.c.bf16 %v132, %v131
    %v198 = vpack.c.bf16 %v134, %v133
    %v199 = vpack.c.bf16 %v136, %v135
    %v200 = vpack.c.bf16 %v138, %v137
    %v201 = vpack.c.bf16 %v140, %v139
    %v202 = vpack.c.bf16 %v142, %v141
    %v203 = vpack.c.bf16 %v144, %v143
    %v204 = vpack.c.bf16 %v146, %v145
    %v205 = vpack.c.bf16 %v148, %v147
    %v206 = vpack.c.bf16 %v150, %v149
    %v207 = vpack.c.bf16 %v152, %v151
    %v208 = vpack.c.bf16 %v154, %v153
    %v209 = vpack.c.bf16 %v156, %v155
    %v210 = vpack.c.bf16 %v158, %v157
    %vm211 = vcmask 523264
    %v213 = vsel %vm211, %v47, 0
    %v216 = vsel %vm211, %v54, 0
    %218 = vmatpush.bf16.msra.mxu0 %v166
    %219 = vmatpush.bf16.msra.mxu0 %v165
    %220 = vmatpush.bf16.msra.mxu0 %v164
    %221 = vmatpush.bf16.msra.mxu0 %v163
    %222 = vmatpush.bf16.msra.mxu0 %v162
    %223 = vmatpush.bf16.msra.mxu0 %v161
    %224 = vmatpush.bf16.msra.mxu0 %v160
    %225 = vmatpush.bf16.msra.mxu0 %v159
    %226 = vmatmul.bf16.gmra.mxu0 %v41
    %v227 = vpop.f32.mrf.mxu0
    %v228 = vadd.f32 0.0, %v227
    %v229 = vpop.f32.mrf.mxu0
    %v230 = vadd.f32 0.0, %v229
    %231 = vmatmul.bf16.gmra.mxu0 %v48
    %v232 = vpop.f32.mrf.mxu0
    %v233 = vadd.f32 0.0, %v232
    %v234 = vpop.f32.mrf.mxu0
    %v235 = vadd.f32 0.0, %v234
    %236 = vdwg.mxu0
    %237 = vmatpush.bf16.msra.mxu0 %v174
    %238 = vmatpush.bf16.msra.mxu0 %v173
    %239 = vmatpush.bf16.msra.mxu0 %v172
    %240 = vmatpush.bf16.msra.mxu0 %v171
    %241 = vmatpush.bf16.msra.mxu0 %v170
    %242 = vmatpush.bf16.msra.mxu0 %v169
    %243 = vmatpush.bf16.msra.mxu0 %v168
    %244 = vmatpush.bf16.msra.mxu0 %v167
    %245 = vmatmul.bf16.gmra.mxu0 %v42
    %v246 = vpop.f32.mrf.mxu0
    %v247 = vadd.f32 %v228, %v246
    %v248 = vpop.f32.mrf.mxu0
    %v249 = vadd.f32 %v230, %v248
    %250 = vmatmul.bf16.gmra.mxu0 %v49
    %v251 = vpop.f32.mrf.mxu0
    %v252 = vadd.f32 %v233, %v251
    %v253 = vpop.f32.mrf.mxu0
    %v254 = vadd.f32 %v235, %v253
    %255 = vdwg.mxu0
    %256 = vmatpush.bf16.msra.mxu0 %v182
    %257 = vmatpush.bf16.msra.mxu0 %v181
    %258 = vmatpush.bf16.msra.mxu0 %v180
    %259 = vmatpush.bf16.msra.mxu0 %v179
    %260 = vmatpush.bf16.msra.mxu0 %v178
    %261 = vmatpush.bf16.msra.mxu0 %v177
    %262 = vmatpush.bf16.msra.mxu0 %v176
    %263 = vmatpush.bf16.msra.mxu0 %v175
    %264 = vmatmul.bf16.gmra.mxu0 %v43
    %v265 = vpop.f32.mrf.mxu0
    %v266 = vadd.f32 %v247, %v265
    %v267 = vpop.f32.mrf.mxu0
    %v268 = vadd.f32 %v249, %v267
    %269 = vmatmul.bf16.gmra.mxu0 %v50
    %v270 = vpop.f32.mrf.mxu0
    %v271 = vadd.f32 %v252, %v270
    %v272 = vpop.f32.mrf.mxu0
    %v273 = vadd.f32 %v254, %v272
    %274 = vdwg.mxu0
    %275 = vmatpush.bf16.msra.mxu0 %v190
    %276 = vmatpush.bf16.msra.mxu0 %v189
    %277 = vmatpush.bf16.msra.mxu0 %v188
    %278 = vmatpush.bf16.msra.mxu0 %v187
    %279 = vmatpush.bf16.msra.mxu0 %v186
    %280 = vmatpush.bf16.msra.mxu0 %v185
    %281 = vmatpush.bf16.msra.mxu0 %v184
    %282 = vmatpush.bf16.msra.mxu0 %v183
    %283 = vmatmul.bf16.gmra.mxu0 %v44
    %v284 = vpop.f32.mrf.mxu0
    %v285 = vadd.f32 %v266, %v284
    %v286 = vpop.f32.mrf.mxu0
    %v287 = vadd.f32 %v268, %v286
    %288 = vmatmul.bf16.gmra.mxu0 %v51
    %v289 = vpop.f32.mrf.mxu0
    %v290 = vadd.f32 %v271, %v289
    %v291 = vpop.f32.mrf.mxu0
    %v292 = vadd.f32 %v273, %v291
    %293 = vdwg.mxu0
    %294 = vmatpush.bf16.msra.mxu0 %v198
    %295 = vmatpush.bf16.msra.mxu0 %v197
    %296 = vmatpush.bf16.msra.mxu0 %v196
    %297 = vmatpush.bf16.msra.mxu0 %v195
    %298 = vmatpush.bf16.msra.mxu0 %v194
    %299 = vmatpush.bf16.msra.mxu0 %v193
    %300 = vmatpush.bf16.msra.mxu0 %v192
    %301 = vmatpush.bf16.msra.mxu0 %v191
    %302 = vmatmul.bf16.gmra.mxu0 %v45
    %v303 = vpop.f32.mrf.mxu0
    %v304 = vadd.f32 %v285, %v303
    %v305 = vpop.f32.mrf.mxu0
    %v306 = vadd.f32 %v287, %v305
    %307 = vmatmul.bf16.gmra.mxu0 %v52
    %v308 = vpop.f32.mrf.mxu0
    %v309 = vadd.f32 %v290, %v308
    %v310 = vpop.f32.mrf.mxu0
    %v311 = vadd.f32 %v292, %v310
    %312 = vdwg.mxu0
    %313 = vmatpush.bf16.msra.mxu0 %v206
    %314 = vmatpush.bf16.msra.mxu0 %v205
    %315 = vmatpush.bf16.msra.mxu0 %v204
    %316 = vmatpush.bf16.msra.mxu0 %v203
    %317 = vmatpush.bf16.msra.mxu0 %v202
    %318 = vmatpush.bf16.msra.mxu0 %v201
    %319 = vmatpush.bf16.msra.mxu0 %v200
    %320 = vmatpush.bf16.msra.mxu0 %v199
    %321 = vmatmul.bf16.gmra.mxu0 %v46
    %v322 = vpop.f32.mrf.mxu0
    %v323 = vadd.f32 %v304, %v322
    %v324 = vpop.f32.mrf.mxu0
    %v325 = vadd.f32 %v306, %v324
    %326 = vmatmul.bf16.gmra.mxu0 %v53
    %v327 = vpop.f32.mrf.mxu0
    %v328 = vadd.f32 %v309, %v327
    %v329 = vpop.f32.mrf.mxu0
    %v330 = vadd.f32 %v311, %v329
    %331 = vdwg.mxu0
    %332 = vmatpush.bf16.msra.mxu0 0
    %333 = vmatpush.bf16.msra.mxu0 0
    %334 = vmatpush.bf16.msra.mxu0 0
    %335 = vmatpush.bf16.msra.mxu0 0
    %336 = vmatpush.bf16.msra.mxu0 %v210
    %337 = vmatpush.bf16.msra.mxu0 %v209
    %338 = vmatpush.bf16.msra.mxu0 %v208
    %339 = vmatpush.bf16.msra.mxu0 %v207
    %340 = vmatmul.bf16.gmra.mxu0 %v213
    %v341 = vpop.f32.mrf.mxu0
    %v342 = vadd.f32 %v323, %v341
    %v343 = vpop.f32.mrf.mxu0
    %v344 = vadd.f32 %v325, %v343
    %345 = vmatmul.bf16.gmra.mxu0 %v216
    %v346 = vpop.f32.mrf.mxu0
    %v347 = vadd.f32 %v328, %v346
    %v348 = vpop.f32.mrf.mxu0
    %v349 = vadd.f32 %v330, %v348
    %350 = vdwg.mxu0
    %vm351 = vcmask 400384
    %352 = vst.msk [vmem:[#allocation2] sm:$0xff] %vm351, %v342
    %353 = vst.msk [vmem:[#allocation2 + $0x8] sm:$0xff] %vm351, %v344
    %354 = vst.msk [vmem:[#allocation2 + $0x10] sm:$0xff] %vm351, %v347
    %355 = vst.msk [vmem:[#allocation2 + $0x18] sm:$0xff] %vm351, %v349
    // Predicated region
    $region10: #{tpu_custom_call.1} parent=1 // pred_check
      _
    $region11: #{tpu_custom_call.1} parent=1 // pred_check_branch
      %357 = sbr.rel (0) target = $region13
    $region12: #{tpu_custom_call.1} parent=1 // pred_region
      %359 = vsyncadd [#allocation3], 0
      %s360 = sshll.u32 [#allocation2], 4
      %s361 = int_to_ptr.vmem [resolvable:$true] %s360
      %s362 = sshll.u32 %s2, 4
      %s363 = int_to_ptr.hbm [resolvable:$true] %s362
      %368 = dma.vmem_to_hbm [thread:$0]  %s361, 512, %s363, [#allocation3], 128, 128, 8
    $region13: #{tpu_custom_call.1} parent=1 // pred_fallthru
      _
    // Predicated region
    $region14: #{tpu_custom_call.1} parent=1 // pred_check
      _
    $region15: #{tpu_custom_call.1} parent=1 // pred_check_branch
      %370 = sbr.rel (0) target = $region17
    $region16: #{tpu_custom_call.1} parent=1 // pred_region
      %372 = dma.done [#allocation3], 512
    $region17: #{tpu_custom_call.1} parent=1 // pred_fallthru
      _
    %373 = vsyncpa [#allocation3], 1

</llo_original>
